<compile_context>
chip_gen: v7x
topology: tpu7x:2x2x1
jax: 0.10.0
libtpu: 0.0.40
codegen_flags: <defaults>
</compile_context>

<pallas_src>
import math

import jax
import jax.numpy as jnp
from jax.experimental import pallas as pl
from jax.experimental.pallas import tpu as pltpu


_LANE = 128
_VMEM_WORKING_SET_BUDGET = 24 * 1024 * 1024   # 2x input + 2x output tile buffers
_VMEM_LIMIT_BYTES = 32 * 1024 * 1024          # safe scoped limit on v5e/v6e/v7x


def _round_up(x, m):
    return ((x + m - 1) // m) * m


def _sublane_multiple(dtype):
    itemsize = jnp.dtype(dtype).itemsize
    if itemsize >= 4:
        return 8
    if itemsize == 2:
        return 16
    return 32


def _make_rmsnorm_kernel(eps: float, inv_dim: float):
    """eps / 1/dim are compile-time constants baked into the kernel body."""

    def kernel(x_ref, w_ref, o_ref):
        # x_ref: (tile_rows, dim_p), w_ref: (1, dim_p) -- resident (grid-invariant block).
        xf = x_ref[...].astype(jnp.float32)
        # Zero-padded lanes contribute 0; divide by the real dim, not dim_p.
        ms = jnp.sum(xf * xf, axis=-1, keepdims=True) * inv_dim      # (tile_rows, 1)
        inv = jax.lax.rsqrt(ms + eps)                                # EUP
        out = (xf * inv) * w_ref[...].astype(jnp.float32)
        o_ref[...] = out.astype(o_ref.dtype)

    return kernel


def rmsnorm(x, weight, eps=1e-6, tile_rows=None):
    """x: [..., dim]; weight: [dim]. Matches the torch RMSNorm forward."""
    orig_shape = x.shape
    dim = orig_shape[-1]
    rows = math.prod(orig_shape[:-1]) if len(orig_shape) > 1 else 1

    dim_p = _round_up(dim, _LANE)                 # lane-dense last dim
    sub = _sublane_multiple(x.dtype)              # dtype-aware sublane multiple
    itemsize = jnp.dtype(x.dtype).itemsize

    # Double-buffered input + double-buffered output per row of the tile.
    bytes_per_row = 2 * dim_p * itemsize * 2
    if tile_rows is None:
        tile_rows = max(sub, (_VMEM_WORKING_SET_BUDGET // bytes_per_row) // sub * sub)
        tile_rows = min(tile_rows, 1024)                      # diminishing returns beyond this
        tile_rows = min(tile_rows, _round_up(rows, sub))      # don't over-pad tiny inputs
    tile_rows = max(sub, _round_up(tile_rows, sub))

    rows_p = _round_up(rows, tile_rows)

    x2 = x.reshape(rows, dim)
    w2 = weight.reshape(1, dim)
    if rows_p != rows or dim_p != dim:
        x2 = jnp.pad(x2, ((0, rows_p - rows), (0, dim_p - dim)))
    if dim_p != dim:
        w2 = jnp.pad(w2, ((0, 0), (0, dim_p - dim)))

    grid = (rows_p // tile_rows,)

    out = pl.pallas_call(
        _make_rmsnorm_kernel(float(eps), 1.0 / float(dim)),
        out_shape=jax.ShapeDtypeStruct((rows_p, dim_p), x.dtype),
        grid_spec=pltpu.PrefetchScalarGridSpec(
            num_scalar_prefetch=0,
            grid=grid,
            in_specs=[
                pl.BlockSpec((tile_rows, dim_p), lambda i: (i, 0)),
                pl.BlockSpec((1, dim_p), lambda i: (0, 0)),   # grid-invariant -> stays resident
            ],
            out_specs=pl.BlockSpec((tile_rows, dim_p), lambda i: (i, 0)),
        ),
        compiler_params=pltpu.CompilerParams(
            dimension_semantics=("parallel",),       # row tiles are independent
            vmem_limit_bytes=_VMEM_LIMIT_BYTES,
        ),
    )(x2, w2)

    out = out[:rows, :dim]
    return out.reshape(orig_shape)


if __name__ == "__main__":
    key = jax.random.PRNGKey(0)
    batch, seq, dim = 2, 8, 32
    x = jax.random.normal(key, (batch, seq, dim), dtype=jnp.float32)
    # Deterministic parameter init: torch.ones(dim) as in the module's __init__.
    weight = jnp.ones((dim,), dtype=jnp.float32)

    y = rmsnorm(x, weight, eps=1e-6)
    jax.block_until_ready(y)

    # Reference check in plain JAX (same math as the torch module).
    xf = x.astype(jnp.float32)
    ref = (x * jax.lax.rsqrt(jnp.mean(xf * xf, axis=-1, keepdims=True) + 1e-6).astype(x.dtype)) * weight
    assert y.shape == x.shape
    assert jnp.allclose(y, ref, atol=1e-5, rtol=1e-5)

    print("KERNEL_OK")
</pallas_src>

<mosaic_0001>
module attributes {stable_mosaic.version = 11 : i64} {
  func.func @kernel(%arg0: i32, %arg1: memref<16x128xf32, #tpu.memory_space<vmem>>, %arg2: memref<1x128xf32, #tpu.memory_space<vmem>>, %arg3: memref<16x128xf32, #tpu.memory_space<vmem>>) attributes {dimension_semantics = [#tpu.dimension_semantics<parallel>], iteration_bounds = array<i64: 1>, scalar_prefetch = 0 : i64, scratch_operands = 0 : i64, tpu.core_type = #tpu.core_type<tc>, window_params = [{transform_indices = @transform_0, window_bounds = array<i64: 16, 128>}, {pipeline_mode = #tpu.pipeline_mode<synchronous>, transform_indices = @transform_1, window_bounds = array<i64: 1, 128>}, {transform_indices = @transform_2, window_bounds = array<i64: 16, 128>}]} {
    %c0 = arith.constant 0 : index
    %c0_0 = arith.constant 0 : index
    %0 = vector.load %arg1[%c0, %c0_0] : memref<16x128xf32, #tpu.memory_space<vmem>>, vector<16x128xf32>
    %1 = arith.mulf %0, %0 : vector<16x128xf32>
    %cst = arith.constant dense<0.000000e+00> : vector<16xf32>
    %2 = vector.multi_reduction <add>, %1, %cst [1] : vector<16x128xf32> to vector<16xf32>
    %3 = vector.shape_cast %2 : vector<16xf32> to vector<16x1xf32>
    %cst_1 = arith.constant 3.125000e-02 : f32
    %4 = vector.broadcast %cst_1 : f32 to vector<16x1xf32>
    %5 = arith.mulf %3, %4 : vector<16x1xf32>
    %cst_2 = arith.constant 9.99999997E-7 : f32
    %6 = vector.broadcast %cst_2 : f32 to vector<16x1xf32>
    %7 = arith.addf %5, %6 : vector<16x1xf32>
    %8 = math.rsqrt %7 : vector<16x1xf32>
    %9 = vector.broadcast %8 : vector<16x1xf32> to vector<16x128xf32>
    %10 = arith.mulf %0, %9 : vector<16x128xf32>
    %c0_3 = arith.constant 0 : index
    %c0_4 = arith.constant 0 : index
    %11 = vector.load %arg2[%c0_3, %c0_4] : memref<1x128xf32, #tpu.memory_space<vmem>>, vector<1x128xf32>
    %12 = vector.broadcast %11 : vector<1x128xf32> to vector<16x128xf32>
    %13 = arith.mulf %10, %12 : vector<16x128xf32>
    %c0_5 = arith.constant 0 : index
    %c0_6 = arith.constant 0 : index
    %14 = vector.load %arg3[%c0_5, %c0_6] : memref<16x128xf32, #tpu.memory_space<vmem>>, vector<16x128xf32>
    tpu.vector_store %arg3[%c0_5, %c0_6], %13 {strides = array<i32>} : memref<16x128xf32, #tpu.memory_space<vmem>>, vector<16x128xf32>,
    return
  }
  func.func @transform_0(%arg0: i32) -> (i32, i32) {
    %c0_i32 = arith.constant 0 : i32
    %c0_i32_0 = arith.constant 0 : i32
    return %arg0, %c0_i32 : i32, i32
  }
  func.func @transform_1(%arg0: i32) -> (i32, i32) {
    %c0_i32 = arith.constant 0 : i32
    %c0_i32_0 = arith.constant 0 : i32
    %c0_i32_1 = arith.constant 0 : i32
    return %c0_i32, %c0_i32_0 : i32, i32
  }
  func.func @transform_2(%arg0: i32) -> (i32, i32) {
    %c0_i32 = arith.constant 0 : i32
    %c0_i32_0 = arith.constant 0 : i32
    return %arg0, %c0_i32 : i32, i32
  }
}

</mosaic_0001>

<llo_original>
// kernel: tpu_custom_call.1
$region0: #{tpu_custom_call.1}
  #allocation0 [shape = 'u32[]', space=smem, size = 0x4, offset = 0x4, fixed_abs, tag = 'smem constant byte address 0x4 - core index']
  #allocation1 [shape = 'u32[144,128]{1,0:T(1,128)}', space=vmem, size = 0x12000, scoped, tag = 'internal scratch']
  %s0 = inlined_call_operand.hbm [shape: f32[16,128], index: 0, kind: input, shape index: {}]
  %s1 = inlined_call_operand.vmem [shape: f32[1,128], index: 1, kind: input, shape index: {}]
  %s2 = inlined_call_operand.hbm [shape: f32[16,128], index: 2, kind: output, shape index: {}]
  %s3 = sld [smem:[#allocation0]]
  $region22: #{tpu_custom_call.1} parent=0
    _
  %s5 = ssub.s32 1, %s3
  %s6 = scalar_select 0, %s5, %s3
  $region1: #{tpu_custom_call.1} parent=0
    #allocation2 [shape = 'u8[8192]{0}', space=vmem, size = 0x2000, scoped, tag = 'input window, operand 0, single buffered']
    #allocation3 [shape = 's32[1]{0}', space=sflag, size = 0x4, scoped, tag = 'scoped memory for tpu_custom_call.1']
    #allocation4 [shape = 's32[1]{0}', space=sflag, size = 0x4, scoped, tag = 'scoped memory for tpu_custom_call.1']
    #allocation5 [shape = 'u8[8192]{0}', space=vmem, size = 0x2000, scoped, tag = 'output window, operand 0, single buffered']
    %7 = vsyncpa [#allocation3], 0
    %8 = vsyncpa [#allocation4], 0
    // Predicated region
    $region2: #{tpu_custom_call.1} parent=1 // pred_check
      _
    $region3: #{tpu_custom_call.1} parent=1 // pred_check_branch
      %10 = sbr.rel (0) target = $region5
    $region4: #{tpu_custom_call.1} parent=1 // pred_region
      %s12 = ssub.s32 256, 256
      %13 = vsyncadd [#allocation3], %s12
      %s14 = sshll.u32 [#allocation2], 4
      %s15 = int_to_ptr.vmem [resolvable:$true] %s14
      %20 = dma.hbm_to_vmem [thread:$0]  %s0, 256, %s15, [#allocation3], 128, 128, 8
    $region5: #{tpu_custom_call.1} parent=1 // pred_fallthru
      _
    // Predicated region
    $region6: #{tpu_custom_call.1} parent=1 // pred_check
      _
    $region7: #{tpu_custom_call.1} parent=1 // pred_check_branch
      %22 = sbr.rel (0) target = $region9
    $region8: #{tpu_custom_call.1} parent=1 // pred_region
      _
    $region9: #{tpu_custom_call.1} parent=1 // pred_fallthru
      _
    // Predicated region
    $region10: #{tpu_custom_call.1} parent=1 // pred_check
      _
    $region11: #{tpu_custom_call.1} parent=1 // pred_check_branch
      %24 = sbr.rel (0) target = $region13
    $region12: #{tpu_custom_call.1} parent=1 // pred_region
      %25 = dma.done [#allocation3], 256
    $region13: #{tpu_custom_call.1} parent=1 // pred_fallthru
      _
    %v26 = vld [vmem:[#allocation2] sm:$0xff]
    %v27 = vld [vmem:[#allocation2 + $0x8] sm:$0xff]
    %v28 = vmul.f32 %v26, %v26
    %v29 = vmul.f32 %v27, %v27
    %30 = vadd.xlane.f32.xlu0 %v28
    %v31 = vpop.xlane.xlu0 %30
    %32 = vadd.xlane.f32.xlu0 %v29
    %v33 = vpop.xlane.xlu0 %32
    %v34 = vmul.f32 %v31, 0.03125
    %v35 = vmul.f32 %v33, 0.03125
    %v36 = vadd.f32 %v34, 1e-06
    %v37 = vadd.f32 %v35, 1e-06
    %v38 = vrsqrt.pop %v36
    %v39 = vrsqrt.pop %v37
    %v40 = vmul.f32 %v26, %v38
    %v41 = vmul.f32 %v27, %v39
    %v42 = vld [vmem:[%s1] sm:$0x1]
    %v44 = vlaneseq
    %v45 = vshrl.u32 %v44, 7
    %v46 = vsub.s32 0, %v45
    %v47 = vrot.slane %v42, %v46
    %v49 = vmul.f32 %v40, %v47
    %v50 = vmul.f32 %v41, %v47
    %51 = vst [vmem:[#allocation5] sm:$0xff] %v49
    %52 = vst [vmem:[#allocation5 + $0x8] sm:$0xff] %v50
    // Predicated region
    $region14: #{tpu_custom_call.1} parent=1 // pred_check
      _
    $region15: #{tpu_custom_call.1} parent=1 // pred_check_branch
      %54 = sbr.rel (0) target = $region17
    $region16: #{tpu_custom_call.1} parent=1 // pred_region
      %s56 = ssub.s32 256, 256
      %57 = vsyncadd [#allocation4], %s56
      %s58 = sshll.u32 [#allocation5], 4
      %s59 = int_to_ptr.vmem [resolvable:$true] %s58
      %64 = dma.vmem_to_hbm [thread:$0]  %s59, 256, %s2, [#allocation4], 128, 128, 8
    $region17: #{tpu_custom_call.1} parent=1 // pred_fallthru
      _
    // Predicated region
    $region18: #{tpu_custom_call.1} parent=1 // pred_check
      _
    $region19: #{tpu_custom_call.1} parent=1 // pred_check_branch
      %66 = sbr.rel (0) target = $region21
    $region20: #{tpu_custom_call.1} parent=1 // pred_region
      %67 = dma.done [#allocation4], 256
    $region21: #{tpu_custom_call.1} parent=1 // pred_fallthru
      _
    %68 = vsyncpa [#allocation3], 1
    %69 = vsyncpa [#allocation4], 1

</llo_original>
